<compile_context>
chip_gen: v6e
topology: v6e:2x2x1
jax: 0.10.0
libtpu: 0.0.40
codegen_flags: <defaults>
</compile_context>

<pallas_src>
import functools

import jax
import jax.numpy as jnp
from jax.experimental import pallas as pl
from jax.experimental.pallas import tpu as pltpu


def _round_up(x, m):
    return ((x + m - 1) // m) * m


@functools.lru_cache(maxsize=1)
def _vmem_limit_bytes():
    """Generation-aware scoped-VMEM cap: ~3/4 of physical, capped at 96 MiB.

    v5e/v6e: 128 MiB physical -> 96 MiB;  v7x: 64 MiB physical -> 48 MiB.
    """
    cap = None
    try:
        cap = getattr(pltpu.get_tpu_info(), "vmem_capacity_bytes", None)
    except Exception:
        cap = None
    if not cap:
        cap = 64 * 1024 * 1024          # conservative (v7x-sized) fallback
    return int(min(96 * 1024 * 1024, (cap * 3) // 4))


# ---------------- Pallas kernels ----------------

def _proj_sigmoid_kernel(h_ref, w_ref, b_ref, out_ref):
    # scores[m] = sigmoid(sum_d h[m, d] * w[d] + b)
    # VPU multiply + cross-lane reduce + EUP sigmoid; a (tm,D)x(D,1) MXU
    # matvec would use <=1/256 of the MXU columns and this op is HBM-bound
    # on reading h, so the VPU/XLU path hits the same roofline.
    prod = h_ref[...] * w_ref[...]                       # (tm, D) * (1, D)
    logits = jnp.sum(prod, axis=-1, keepdims=True)       # (tm, 1)
    out_ref[...] = jax.nn.sigmoid(logits + b_ref[0])


def _pool_adj_matmul_kernel(a_ref, b_ref, o_ref, acc_ref):
    # (gb[idx, :] @ gb[:, idx]) > 0  ==  ((gb @ gb) > 0)[idx][:, idx]
    # a: (tm, tk) bf16 0/1 rows, b: (tk, tn) bf16 0/1 cols, f32 accumulation
    # (exact 0/1 counting); threshold applied on the final reduction step.
    @pl.when(pl.program_id(2) == 0)
    def _():
        acc_ref[...] = jnp.zeros_like(acc_ref)

    acc_ref[...] += jnp.dot(a_ref[...], b_ref[...],
                            preferred_element_type=jnp.float32)

    @pl.when(pl.program_id(2) == pl.num_programs(2) - 1)
    def _():
        o_ref[...] = (acc_ref[...] > 0.0).astype(o_ref.dtype)


# ---------------- wrappers ----------------

def _project_scores(h, w, b):
    """scores = sigmoid(h @ w + b), returned as (N,) f32."""
    N, D = h.shape
    w_row = jnp.reshape(w, (1, D)).astype(jnp.float32)    # (1, D) VMEM row
    b1 = jnp.reshape(b, (-1,)).astype(jnp.float32)        # (1,) SMEM scalar

    if N <= 512:
        tm = _round_up(N, 8)       # single row block
    else:
        tm = 512
    Np = _round_up(N, tm)
    h_p = h if Np == N else jnp.pad(h, ((0, Np - N), (0, 0)))

    out = pl.pallas_call(
        _proj_sigmoid_kernel,
        out_shape=jax.ShapeDtypeStruct((Np, 1), jnp.float32),
        grid=(Np // tm,),
        in_specs=[
            pl.BlockSpec((tm, D), lambda i: (i, 0)),
            pl.BlockSpec((1, D), lambda i: (0, 0)),
            pl.BlockSpec(memory_space=pltpu.MemorySpace.SMEM),
        ],
        out_specs=pl.BlockSpec((tm, 1), lambda i: (i, 0)),
        compiler_params=pltpu.CompilerParams(
            dimension_semantics=("parallel",),
            vmem_limit_bytes=_vmem_limit_bytes()),
    )(h_p, w_row, b1)
    return out[:N, 0]


def _pooled_adjacency(g, idx):
    """((g!=0) @ (g!=0) > 0)[idx][:, idx] as a (K,N) x (N,K) tiled matmul."""
    N = g.shape[0]
    K = idx.shape[0]

    tm = min(512, _round_up(K, 16))     # bf16-native sublane tile (16, 128)
    tn = min(512, _round_up(K, 128))
    tk = min(2048, _round_up(N, 128))   # large contraction tile, ~8 MiB dbuf

    # v7x has 2 TensorCores sharded over the "parallel" grid axes; if both
    # parallel axes would collapse to a single step and K is big enough to be
    # worth splitting, halve tm (16-aligned).  Near-free on v5e/v6e.
    if K >= 256 and _round_up(K, tm) // tm < 2 and _round_up(K, tn) // tn < 2:
        tm = max(16, _round_up(_round_up(K, 16) // 2, 16))

    Mp = _round_up(K, tm)
    Np_ = _round_up(K, tn)
    Kp = _round_up(N, tk)

    # Pad the O(K) index vectors (fuses into the gathers) instead of padding
    # the K x N slabs; index 0 is always valid and the extra rows/cols are
    # sliced off at the end.
    idx_m = idx if Mp == K else jnp.pad(idx, (0, Mp - K))
    idx_n = idx if Np_ == K else jnp.pad(idx, (0, Np_ - K))

    # Binarize fused into the gathers — no N x N pass.  0/1 is exact in bf16
    # and f32 accumulation keeps counts exact, so the >0 threshold is exact.
    a_rows = (g[idx_m, :] != 0.0).astype(jnp.bfloat16)    # (Mp, N)
    b_cols = (g[:, idx_n] != 0.0).astype(jnp.bfloat16)    # (N, Np_)
    # TODO(synk): for symmetric (undirected) graphs the strided column gather
    # can be dropped entirely by reusing a_rows and contracting the last axes.

    if Kp > N:
        # Contraction-axis zero-pad only; zeros add nothing to the counts.
        a_rows = jnp.pad(a_rows, ((0, 0), (0, Kp - N)))
        b_cols = jnp.pad(b_cols, ((0, Kp - N), (0, 0)))

    out = pl.pallas_call(
        _pool_adj_matmul_kernel,
        out_shape=jax.ShapeDtypeStruct((Mp, Np_), jnp.float32),
        grid=(Mp // tm, Np_ // tn, Kp // tk),
        in_specs=[
            pl.BlockSpec((tm, tk), lambda i, j, kk: (i, kk)),
            pl.BlockSpec((tk, tn), lambda i, j, kk: (kk, j)),
        ],
        out_specs=pl.BlockSpec((tm, tn), lambda i, j, kk: (i, j)),
        scratch_shapes=[pltpu.VMEM((tm, tn), jnp.float32)],
        compiler_params=pltpu.CompilerParams(
            dimension_semantics=("parallel", "parallel", "arbitrary"),
            vmem_limit_bytes=_vmem_limit_bytes()),
    )(a_rows, b_cols)
    return out[:K, :K]


def pool_forward(g, h, w, b, k, ep=None):
    """JAX/Pallas equivalent of Pool.forward(g, h, ep).

    g: (N, N) float32 adjacency
    h: (N, D) float32 node features
    w: (D, 1) float32 projection weight (Linear(in_dim, 1).weight.T)
    b: (1,)   float32 projection bias
    Returns (g_new, new_h, idx).
    """
    N, D = h.shape

    # TODO(synk): nn.Dropout(p) is treated as identity (eval mode / p == 0).
    scores = _project_scores(h, w, b)

    # top-k selection (glue; no clean Pallas equivalent)
    k_sel = max(2, int(k * N))
    values, idx = jax.lax.top_k(scores, k_sel)

    # new_h = h[idx, :] * values[:, None]
    # Left to XLA: gather + broadcast-multiply fuse into one mem-bound op.
    new_h = h[idx, :] * values[:, None]

    # Pooled adjacency after top-k: O(K^2 * N) instead of O(N^3).
    g_new = _pooled_adjacency(g, idx)
    return g_new, new_h, idx


if __name__ == "__main__":
    # Small shapes consistent with the module: N nodes, in_dim features.
    N, D = 16, 32
    k, p = 0.5, 0.0

    key = jax.random.PRNGKey(0)
    kg, kh, kw, kb = jax.random.split(key, 4)

    # Random binary adjacency (float, as torch would pass)
    g = (jax.random.uniform(kg, (N, N)) > 0.7).astype(jnp.float32)
    h = jax.random.normal(kh, (N, D), dtype=jnp.float32)

    # Deterministic Linear(in_dim, 1) init (PyTorch-style uniform bound)
    bound = 1.0 / (D ** 0.5)
    w = jax.random.uniform(kw, (D, 1), minval=-bound, maxval=bound,
                           dtype=jnp.float32)
    b = jax.random.uniform(kb, (1,), minval=-bound, maxval=bound,
                           dtype=jnp.float32)

    g_new, new_h, idx = pool_forward(g, h, w, b, k)
    jax.block_until_ready((g_new, new_h, idx))

    k_sel = max(2, int(k * N))
    assert g_new.shape == (k_sel, k_sel)
    assert new_h.shape == (k_sel, D)
    assert idx.shape == (k_sel,)

    # Reference check: restructured pooled adjacency must equal the original
    # (gb @ gb > 0)[idx][:, idx], and scores must match the dense projection.
    gb_ref = (g != 0.0).astype(jnp.float32)
    g_ref = ((gb_ref @ gb_ref) > 0.0).astype(jnp.float32)[idx, :][:, idx]
    assert jnp.array_equal(g_new, g_ref)

    scores_ref = jax.nn.sigmoid(h @ w + b[None, :])[:, 0]
    scores_krn = _project_scores(h, w, b)
    assert jnp.allclose(scores_krn, scores_ref, rtol=1e-5, atol=1e-5)

    new_h_ref = h[idx, :] * jax.lax.top_k(scores_ref, k_sel)[0][:, None]
    assert jnp.allclose(new_h, new_h_ref, rtol=1e-5, atol=1e-5)

    print("KERNEL_OK")
</pallas_src>

<mosaic_0001>
module attributes {stable_mosaic.version = 11 : i64} {
  func.func @_proj_sigmoid_kernel(%arg0: i32, %arg1: memref<16x32xf32, #tpu.memory_space<vmem>>, %arg2: memref<1x32xf32, #tpu.memory_space<vmem>>, %arg3: memref<1xf32, #tpu.memory_space<smem>>, %arg4: memref<16x1xf32, #tpu.memory_space<vmem>>) attributes {dimension_semantics = [#tpu.dimension_semantics<parallel>], iteration_bounds = array<i64: 1>, scalar_prefetch = 0 : i64, scratch_operands = 0 : i64, tpu.core_type = #tpu.core_type<tc>, window_params = [{transform_indices = @transform_0, window_bounds = array<i64: 16, 32>}, {pipeline_mode = #tpu.pipeline_mode<synchronous>, transform_indices = @transform_1, window_bounds = array<i64: 1, 32>}, {transform_indices = @transform_2, window_bounds = array<i64: 1>}, {transform_indices = @transform_3, window_bounds = array<i64: 16, 1>}]} {
    %c0 = arith.constant 0 : index
    %c0_0 = arith.constant 0 : index
    %0 = vector.load %arg1[%c0, %c0_0] : memref<16x32xf32, #tpu.memory_space<vmem>>, vector<16x32xf32>
    %c0_1 = arith.constant 0 : index
    %c0_2 = arith.constant 0 : index
    %1 = vector.load %arg2[%c0_1, %c0_2] : memref<1x32xf32, #tpu.memory_space<vmem>>, vector<1x32xf32>
    %2 = vector.broadcast %1 : vector<1x32xf32> to vector<16x32xf32>
    %3 = arith.mulf %0, %2 : vector<16x32xf32>
    %cst = arith.constant dense<0.000000e+00> : vector<16xf32>
    %4 = vector.multi_reduction <add>, %3, %cst [1] : vector<16x32xf32> to vector<16xf32>
    %5 = vector.shape_cast %4 : vector<16xf32> to vector<16x1xf32>
    %c0_3 = arith.constant 0 : index
    %6 = memref.load %arg3[%c0_3] : memref<1xf32, #tpu.memory_space<smem>>
    %7 = vector.broadcast %6 : f32 to vector<16x1xf32>
    %8 = arith.addf %5, %7 : vector<16x1xf32>
    %9 = arith.negf %8 : vector<16x1xf32>
    %10 = math.exp %9 : vector<16x1xf32>
    %cst_4 = arith.constant 1.000000e+00 : f32
    %11 = vector.broadcast %cst_4 : f32 to vector<16x1xf32>
    %12 = arith.addf %11, %10 : vector<16x1xf32>
    %13 = arith.divf %11, %12 : vector<16x1xf32>
    %c0_5 = arith.constant 0 : index
    %c0_6 = arith.constant 0 : index
    %14 = vector.load %arg4[%c0_5, %c0_6] : memref<16x1xf32, #tpu.memory_space<vmem>>, vector<16x1xf32>
    tpu.vector_store %arg4[%c0_5, %c0_6], %13 {strides = array<i32>} : memref<16x1xf32, #tpu.memory_space<vmem>>, vector<16x1xf32>,
    return
  }
  func.func @transform_0(%arg0: i32) -> (i32, i32) {
    %c0_i32 = arith.constant 0 : i32
    %c0_i32_0 = arith.constant 0 : i32
    return %arg0, %c0_i32 : i32, i32
  }
  func.func @transform_1(%arg0: i32) -> (i32, i32) {
    %c0_i32 = arith.constant 0 : i32
    %c0_i32_0 = arith.constant 0 : i32
    %c0_i32_1 = arith.constant 0 : i32
    return %c0_i32, %c0_i32_0 : i32, i32
  }
  func.func @transform_2(%arg0: i32) -> i32 {
    %c0_i32 = arith.constant 0 : i32
    %c0_i32_0 = arith.constant 0 : i32
    return %c0_i32 : i32
  }
  func.func @transform_3(%arg0: i32) -> (i32, i32) {
    %c0_i32 = arith.constant 0 : i32
    %c0_i32_0 = arith.constant 0 : i32
    return %arg0, %c0_i32 : i32, i32
  }
}

</mosaic_0001>

<llo_original>
// kernel: tpu_custom_call.1
$region0: #{tpu_custom_call.1}
  #allocation0 [shape = 'u32[]', space=smem, size = 0x4, offset = 0x4, fixed_abs, tag = 'smem constant byte address 0x4 - core index']
  #allocation1 [shape = 'u32[144,128]{1,0:T(1,128)}', space=vmem, size = 0x12000, scoped, tag = 'internal scratch']
  #allocation2 [shape = 'f32[1]{0:T(128)S(6)}', space=smem, size = 0x200, scoped, tag = 'scoped memory for tpu_custom_call.1']
  %s0 = inlined_call_operand.hbm [shape: f32[16,32], index: 0, kind: input, shape index: {}]
  %s1 = inlined_call_operand.vmem [shape: f32[1,32], index: 1, kind: input, shape index: {}]
  %s2 = inlined_call_operand.<no memory space> [shape: f32[1], index: 2, kind: input, shape index: {}]
  %s3 = inlined_call_operand.vmem [shape: f32[16,1], index: 3, kind: output, shape index: {}]
  %s4 = sld [smem:[#allocation0]]
  $region26: #{tpu_custom_call.1} parent=0
    _
  %s6 = ssub.s32 1, %s4
  %s7 = scalar_select 0, %s6, %s4
  %8 = sst [smem:[#allocation2]] %s2
  $region1: #{tpu_custom_call.1} parent=0
    #allocation3 [shape = 'u8[8192]{0}', space=vmem, size = 0x2000, scoped, tag = 'input window, operand 0, single buffered']
    #allocation4 [shape = 's32[1]{0}', space=sflag, size = 0x4, scoped, tag = 'scoped memory for tpu_custom_call.1']
    %9 = vsyncpa [#allocation4], 0
    // Predicated region
    $region2: #{tpu_custom_call.1} parent=1 // pred_check
      _
    $region3: #{tpu_custom_call.1} parent=1 // pred_check_branch
      %11 = sbr.rel (0) target = $region5
    $region4: #{tpu_custom_call.1} parent=1 // pred_region
      %s13 = ssub.s32 256, 256
      %14 = vsyncadd [#allocation4], %s13
      %s15 = sshll.u32 [#allocation3], 4
      %s16 = int_to_ptr.vmem [resolvable:$true] %s15
      %21 = dma.hbm_to_vmem [thread:$0]  %s0, 256, %s16, [#allocation4], 128, 128, 8
    $region5: #{tpu_custom_call.1} parent=1 // pred_fallthru
      _
    // Predicated region
    $region6: #{tpu_custom_call.1} parent=1 // pred_check
      _
    $region7: #{tpu_custom_call.1} parent=1 // pred_check_branch
      %23 = sbr.rel (0) target = $region9
    $region8: #{tpu_custom_call.1} parent=1 // pred_region
      _
    $region9: #{tpu_custom_call.1} parent=1 // pred_fallthru
      _
    // Predicated region
    $region10: #{tpu_custom_call.1} parent=1 // pred_check
      _
    $region11: #{tpu_custom_call.1} parent=1 // pred_check_branch
      %25 = sbr.rel (0) target = $region13
    $region12: #{tpu_custom_call.1} parent=1 // pred_region
      _
    $region13: #{tpu_custom_call.1} parent=1 // pred_fallthru
      _
    // Predicated region
    $region14: #{tpu_custom_call.1} parent=1 // pred_check
      _
    $region15: #{tpu_custom_call.1} parent=1 // pred_check_branch
      %27 = sbr.rel (0) target = $region17
    $region16: #{tpu_custom_call.1} parent=1 // pred_region
      %28 = dma.done [#allocation4], 256
    $region17: #{tpu_custom_call.1} parent=1 // pred_fallthru
      _
    %v29 = vld [vmem:[#allocation3] sm:$0xff]
    %v30 = vld [vmem:[#allocation3 + $0x8] sm:$0xff]
    %v31 = vld [vmem:[%s1] sm:$0x1]
    %v33 = vlaneseq
    %v34 = vshrl.u32 %v33, 7
    %v35 = vsub.s32 0, %v34
    %v36 = vrot.slane %v31, %v35
    %v38 = vmul.f32 %v29, %v36
    %v39 = vmul.f32 %v30, %v36
    %vm40 = vcmask 261120
    %v41 = vsel %vm40, %v38, 0.0
    %42 = vadd.xlane.f32.xlu0 %v41
    %v43 = vpop.xlane.xlu0 %42
    %v44 = vsel %vm40, %v39, 0.0
    %45 = vadd.xlane.f32.xlu0 %v44
    %v46 = vpop.xlane.xlu0 %45
    %s47 = sld [smem:[#allocation2]]
    %v48 = vstv %s47
    %v49 = vadd.f32 %v43, %v48
    %v50 = vadd.f32 %v46, %v48
    %v51 = vxor.u32 %v49, 2147483648
    %v52 = vxor.u32 %v50, 2147483648
    %v53 = vmul.f32 %v51, 1.442695
    %v54 = vpow.pop %v53
    %v55 = vmul.f32 %v52, 1.442695
    %v56 = vpow.pop %v55
    %v57 = vadd.f32 %v54, 1.0
    %v58 = vadd.f32 %v56, 1.0
    %v59 = vrcp.pop %v57
    %v60 = vmul.f32 1.0, %v59
    %v61 = vrcp.pop %v58
    %v62 = vmul.f32 1.0, %v61
    %vm63 = vcmask 7168
    %64 = vst.msk [vmem:[%s3] sm:$0xff] %vm63, %v60
    %65 = vst.msk [vmem:[%s3 + $0x8] sm:$0xff] %vm63, %v62
    // Predicated region
    $region18: #{tpu_custom_call.1} parent=1 // pred_check
      _
    $region19: #{tpu_custom_call.1} parent=1 // pred_check_branch
      %67 = sbr.rel (0) target = $region21
    $region20: #{tpu_custom_call.1} parent=1 // pred_region
      _
    $region21: #{tpu_custom_call.1} parent=1 // pred_fallthru
      _
    // Predicated region
    $region22: #{tpu_custom_call.1} parent=1 // pred_check
      _
    $region23: #{tpu_custom_call.1} parent=1 // pred_check_branch
      %69 = sbr.rel (0) target = $region25
    $region24: #{tpu_custom_call.1} parent=1 // pred_region
      _
    $region25: #{tpu_custom_call.1} parent=1 // pred_fallthru
      _
    %70 = vsyncpa [#allocation4], 1

</llo_original>
